<compile_context>
chip_gen: v5e
topology: v5e:2x2
jax: 0.10.0
libtpu: 0.0.40
codegen_flags: <defaults>
</compile_context>

<pallas_src>
import math
from functools import partial

import jax
import jax.numpy as jnp
from jax.experimental import pallas as pl
from jax.experimental.pallas import tpu as pltpu


_SQRT_HALF = 0.7071067811865476
_SQRT_2_OVER_PI = 0.7978845608028654


def _round_up(n, m):
    return -(-n // m) * m


def _erf_approx(x):
    # Abramowitz & Stegun 7.1.26, |error| <= 1.5e-7.
    p = 0.3275911
    a1, a2, a3, a4, a5 = (0.254829592, -0.284496736, 1.421413741,
                          -1.453152027, 1.061405429)
    ax = jnp.abs(x)
    # Divide -> EUP reciprocal (frees a VALU op per element on v6e/v7x).
    t = pl.reciprocal(1.0 + p * ax, approx=True)
    poly = t * (a1 + t * (a2 + t * (a3 + t * (a4 + t * a5))))
    y = 1.0 - poly * jnp.exp(-(ax * ax))
    return jnp.where(x < 0, -y, y)


def _gelu_erf(x):
    # Matches PyTorch F.gelu default (erf-based).
    return 0.5 * x * (1.0 + _erf_approx(x * _SQRT_HALF))


def _gelu_tanh(x):
    # Cheaper VALU chain (single EUP tanh); slightly different low-order bits.
    return 0.5 * x * (1.0 + jnp.tanh(_SQRT_2_OVER_PI * (x + 0.044715 * x * x * x)))


def ffn_kernel(x_ref, w1_ref, b1_ref, w2_ref, b2_ref, o_ref, acc_ref,
               *, approx_gelu: bool):
    # Grid: (row tiles, Dh chunks).  x block (bm, D) bf16, weights are bf16
    # chunks, biases f32, accumulator f32.
    k = pl.program_id(1)

    @pl.when(k == 0)
    def _():
        acc_ref[...] = jnp.zeros_like(acc_ref)

    # First projection for this hidden chunk: (bm, D) @ (D, tdh) -> f32.
    h = jnp.dot(x_ref[...], w1_ref[...], preferred_element_type=jnp.float32)
    h = h + b1_ref[...]                       # bias in f32
    h = _gelu_tanh(h) if approx_gelu else _gelu_erf(h)
    # Dropout(p=0.0) is the identity -> nothing to do.
    # TODO(synk): dropout with p > 0 (training mode) is not implemented; the
    # ViTConfig default dropout=0.0 makes it the identity.

    # Second projection chunk, accumulated over Dh chunks in f32.
    h = h.astype(w2_ref.dtype)                # bf16 MXU operand
    acc_ref[...] += jnp.dot(h, w2_ref[...], preferred_element_type=jnp.float32)

    @pl.when(k == pl.num_programs(1) - 1)
    def _():
        o_ref[...] = (acc_ref[...] + b2_ref[...]).astype(o_ref.dtype)


def _pick_dh_chunk(dh):
    for c in (512, 384, 256, 128):
        if dh >= c and dh % c == 0:
            return c
    return dh


def feed_forward(x, params, *, compute_dtype=jnp.bfloat16, block_rows=None,
                 approx_gelu=False):
    """x: (..., D).  params: w1 (D, Dh), b1 (1, Dh), w2 (Dh, D), b2 (1, D).

    Weights are pre-transposed to (in, out) so y = x @ W + b matches PyTorch's
    x @ W.T + b.  compute_dtype=jnp.float32 is a debug-only (slow) path.
    """
    orig_shape = x.shape
    out_dtype = x.dtype
    D = orig_shape[-1]
    Dh = params["w1"].shape[1]

    # Flatten all leading axes into one token axis -> big sublane-dense matmuls.
    # Cast to compute dtype in the wrapper (XLA fuses it): halves x DMA bytes
    # and the double-buffered input tile.
    x2 = x.reshape(-1, D).astype(compute_dtype)
    n_tok = x2.shape[0]

    if block_rows is None:
        if n_tok <= 128:
            block_rows = _round_up(n_tok, 16)
        else:
            # >= 2 row steps so a "parallel" row axis can split across v7x's
            # two TensorCores; cap at 256 rows per tile.
            block_rows = min(256, _round_up(-(-n_tok // 2), 16))
    bm = block_rows
    n_pad = _round_up(n_tok, bm)
    if n_pad != n_tok:
        x2 = jnp.pad(x2, ((0, n_pad - n_tok), (0, 0)))

    tdh = _pick_dh_chunk(Dh)

    w1 = params["w1"].astype(compute_dtype)
    w2 = params["w2"].astype(compute_dtype)
    b1 = params["b1"].astype(jnp.float32)
    b2 = params["b2"].astype(jnp.float32)

    itemsize = jnp.dtype(compute_dtype).itemsize
    bytes_accessed = (x2.size * itemsize + w1.size * itemsize + w2.size * itemsize
                      + b1.size * 4 + b2.size * 4
                      + n_pad * D * jnp.dtype(out_dtype).itemsize)
    cost = pl.CostEstimate(flops=4 * n_pad * D * Dh,
                           transcendentals=2 * n_pad * Dh,
                           bytes_accessed=bytes_accessed)

    out = pl.pallas_call(
        partial(ffn_kernel, approx_gelu=approx_gelu),
        out_shape=jax.ShapeDtypeStruct((n_pad, D), out_dtype),
        grid=(n_pad // bm, Dh // tdh),
        in_specs=[
            pl.BlockSpec((bm, D), lambda i, k: (i, 0)),     # x tokens (bf16)
            pl.BlockSpec((D, tdh), lambda i, k: (0, k)),    # w1 chunk
            pl.BlockSpec((1, tdh), lambda i, k: (0, k)),    # b1 chunk
            pl.BlockSpec((tdh, D), lambda i, k: (k, 0)),    # w2 chunk
            pl.BlockSpec((1, D), lambda i, k: (0, 0)),      # b2 (resident)
        ],
        out_specs=pl.BlockSpec((bm, D), lambda i, k: (i, 0)),
        scratch_shapes=[pltpu.VMEM((bm, D), jnp.float32)],  # f32 accumulator
        compiler_params=pltpu.CompilerParams(
            dimension_semantics=("parallel", "arbitrary"),
            vmem_limit_bytes=32 * 1024 * 1024),
        cost_estimate=cost,
    )(x2, w1, b1, w2, b2)

    if n_pad != n_tok:
        out = out[:n_tok]
    return out.reshape(orig_shape)


def init_params(key, dim):
    """Mimics nn.Linear init (uniform(-1/sqrt(fan_in), 1/sqrt(fan_in))).

    Weights stored pre-transposed as (D_in, D_out)."""
    hidden = 4 * dim
    k1, k2, k3, k4 = jax.random.split(key, 4)
    b_in = 1.0 / math.sqrt(dim)
    b_hid = 1.0 / math.sqrt(hidden)
    return {
        "w1": jax.random.uniform(k1, (dim, hidden), jnp.float32, -b_in, b_in),
        "b1": jax.random.uniform(k2, (1, hidden), jnp.float32, -b_in, b_in),
        "w2": jax.random.uniform(k3, (hidden, dim), jnp.float32, -b_hid, b_hid),
        "b2": jax.random.uniform(k4, (1, dim), jnp.float32, -b_hid, b_hid),
    }


def reference_feed_forward(x, params, compute_dtype=jnp.bfloat16):
    """Pure-JAX reference with the same mixed-precision policy as the kernel."""
    w1 = params["w1"].astype(compute_dtype)
    w2 = params["w2"].astype(compute_dtype)
    h = jnp.dot(x.astype(compute_dtype), w1,
                preferred_element_type=jnp.float32) + params["b1"]
    h = jax.nn.gelu(h, approximate=False)       # exact erf GELU == F.gelu default
    h = h.astype(compute_dtype)
    y = jnp.dot(h, w2, preferred_element_type=jnp.float32) + params["b2"]
    return y.astype(x.dtype)


if __name__ == "__main__":
    # Small ViT-consistent shapes: dim=128 (lane-dense, like real ViT dims e.g.
    # 768 = 6*128), hidden = 4*dim = 512, seq=8, batch=2.
    B, S, D = 2, 8, 128

    key = jax.random.PRNGKey(0)
    kx, kp = jax.random.split(key)
    x = jax.random.normal(kx, (B, S, D), jnp.float32)
    params = init_params(kp, D)

    out = feed_forward(x, params)
    out = jax.block_until_ready(out)

    ref = reference_feed_forward(x, params)
    assert out.shape == (B, S, D)
    max_err = jnp.max(jnp.abs(out - ref))
    assert jnp.allclose(out, ref, atol=5e-3, rtol=5e-3), f"max abs err {max_err}"

    print("KERNEL_OK")
</pallas_src>

<mosaic_0001>
module attributes {stable_mosaic.version = 11 : i64} {
  func.func @ffn_kernel(%arg0: i32, %arg1: i32, %arg2: memref<16x128xbf16, #tpu.memory_space<vmem>>, %arg3: memref<128x512xbf16, #tpu.memory_space<vmem>>, %arg4: memref<1x512xf32, #tpu.memory_space<vmem>>, %arg5: memref<512x128xbf16, #tpu.memory_space<vmem>>, %arg6: memref<1x128xf32, #tpu.memory_space<vmem>>, %arg7: memref<16x128xf32, #tpu.memory_space<vmem>>, %arg8: memref<16x128xf32, #tpu.memory_space<vmem>>) attributes {dimension_semantics = [#tpu.dimension_semantics<parallel>, #tpu.dimension_semantics<arbitrary>], iteration_bounds = array<i64: 1, 1>, scalar_prefetch = 0 : i64, scratch_operands = 1 : i64, tpu.core_type = #tpu.core_type<tc>, window_params = [{transform_indices = @transform_0, window_bounds = array<i64: 16, 128>}, {transform_indices = @transform_1, window_bounds = array<i64: 128, 512>}, {transform_indices = @transform_2, window_bounds = array<i64: 1, 512>}, {transform_indices = @transform_3, window_bounds = array<i64: 512, 128>}, {pipeline_mode = #tpu.pipeline_mode<synchronous>, transform_indices = @transform_4, window_bounds = array<i64: 1, 128>}, {transform_indices = @transform_5, window_bounds = array<i64: 16, 128>}]} {
    %c0_i32 = arith.constant 0 : i32
    %0 = arith.cmpi eq, %arg1, %c0_i32 : i32
    %1 = arith.extui %0 : i1 to i32
    %c0_i32_0 = arith.constant 0 : i32
    %2 = arith.cmpi ne, %1, %c0_i32_0 : i32
    scf.if %2 {
      %cst_29 = arith.constant 0.000000e+00 : f32
      %57 = vector.broadcast %cst_29 : f32 to vector<16x128xf32>
      %c0_30 = arith.constant 0 : index
      %c0_31 = arith.constant 0 : index
      %58 = vector.load %arg8[%c0_30, %c0_31] : memref<16x128xf32, #tpu.memory_space<vmem>>, vector<16x128xf32>
      tpu.vector_store %arg8[%c0_30, %c0_31], %57 {strides = array<i32>} : memref<16x128xf32, #tpu.memory_space<vmem>>, vector<16x128xf32>,
    } else {
    }
    %c0 = arith.constant 0 : index
    %c0_1 = arith.constant 0 : index
    %3 = vector.load %arg2[%c0, %c0_1] : memref<16x128xbf16, #tpu.memory_space<vmem>>, vector<16x128xbf16>
    %c0_2 = arith.constant 0 : index
    %c0_3 = arith.constant 0 : index
    %4 = vector.load %arg3[%c0_2, %c0_3] : memref<128x512xbf16, #tpu.memory_space<vmem>>, vector<128x512xbf16>
    %cst = arith.constant dense<0.000000e+00> : vector<16x512xf32>
    %5 = tpu.matmul %3, %4, %cst {dimension_numbers = #tpu.dot_dimension_numbers<[1], [0], [0], [1], [0, 0, 1, 1], [], []>} : vector<16x128xbf16>, vector<128x512xbf16>, vector<16x512xf32> -> vector<16x512xf32>
    %c0_4 = arith.constant 0 : index
    %c0_5 = arith.constant 0 : index
    %6 = vector.load %arg4[%c0_4, %c0_5] : memref<1x512xf32, #tpu.memory_space<vmem>>, vector<1x512xf32>
    %7 = vector.broadcast %6 : vector<1x512xf32> to vector<16x512xf32>
    %8 = arith.addf %5, %7 : vector<16x512xf32>
    %cst_6 = arith.constant 5.000000e-01 : f32
    %9 = vector.broadcast %cst_6 : f32 to vector<16x512xf32>
    %10 = arith.mulf %9, %8 : vector<16x512xf32>
    %cst_7 = arith.constant 0.707106769 : f32
    %11 = vector.broadcast %cst_7 : f32 to vector<16x512xf32>
    %12 = arith.mulf %8, %11 : vector<16x512xf32>
    %13 = math.absf %12 : vector<16x512xf32>
    %cst_8 = arith.constant 0.327591091 : f32
    %14 = vector.broadcast %cst_8 : f32 to vector<16x512xf32>
    %15 = arith.mulf %14, %13 : vector<16x512xf32>
    %cst_9 = arith.constant 1.000000e+00 : f32
    %16 = vector.broadcast %cst_9 : f32 to vector<16x512xf32>
    %17 = arith.addf %16, %15 : vector<16x512xf32>
    %18 = tpu.reciprocal %17 {approx = true} : vector<16x512xf32> -> vector<16x512xf32>
    %cst_10 = arith.constant 1.06140542 : f32
    %19 = vector.broadcast %cst_10 : f32 to vector<16x512xf32>
    %20 = arith.mulf %18, %19 : vector<16x512xf32>
    %cst_11 = arith.constant -1.45315206 : f32
    %21 = vector.broadcast %cst_11 : f32 to vector<16x512xf32>
    %22 = arith.addf %21, %20 : vector<16x512xf32>
    %23 = arith.mulf %18, %22 : vector<16x512xf32>
    %cst_12 = arith.constant 1.42141378 : f32
    %24 = vector.broadcast %cst_12 : f32 to vector<16x512xf32>
    %25 = arith.addf %24, %23 : vector<16x512xf32>
    %26 = arith.mulf %18, %25 : vector<16x512xf32>
    %cst_13 = arith.constant -0.284496725 : f32
    %27 = vector.broadcast %cst_13 : f32 to vector<16x512xf32>
    %28 = arith.addf %27, %26 : vector<16x512xf32>
    %29 = arith.mulf %18, %28 : vector<16x512xf32>
    %cst_14 = arith.constant 0.254829586 : f32
    %30 = vector.broadcast %cst_14 : f32 to vector<16x512xf32>
    %31 = arith.addf %30, %29 : vector<16x512xf32>
    %32 = arith.mulf %18, %31 : vector<16x512xf32>
    %33 = arith.mulf %13, %13 : vector<16x512xf32>
    %cst_15 = arith.constant 0.000000e+00 : f32
    %34 = vector.broadcast %cst_15 : f32 to vector<16x512xf32>
    %35 = arith.subf %34, %33 : vector<16x512xf32>
    %36 = math.exp %35 : vector<16x512xf32>
    %37 = arith.mulf %32, %36 : vector<16x512xf32>
    %cst_16 = arith.constant 1.000000e+00 : f32
    %38 = vector.broadcast %cst_16 : f32 to vector<16x512xf32>
    %39 = arith.subf %38, %37 : vector<16x512xf32>
    %cst_17 = arith.constant 0.000000e+00 : f32
    %40 = vector.broadcast %cst_17 : f32 to vector<16x512xf32>
    %41 = arith.cmpf olt, %12, %40 : vector<16x512xf32>
    %cst_18 = arith.constant 0.000000e+00 : f32
    %42 = vector.broadcast %cst_18 : f32 to vector<16x512xf32>
    %43 = arith.subf %42, %39 : vector<16x512xf32>
    %44 = arith.select %41, %43, %39 : vector<16x512xi1>, vector<16x512xf32>
    %cst_19 = arith.constant 1.000000e+00 : f32
    %45 = vector.broadcast %cst_19 : f32 to vector<16x512xf32>
    %46 = arith.addf %45, %44 : vector<16x512xf32>
    %47 = arith.mulf %10, %46 : vector<16x512xf32>
    %48 = arith.truncf %47 : vector<16x512xf32> to vector<16x512xbf16>
    %c0_20 = arith.constant 0 : index
    %c0_21 = arith.constant 0 : index
    %49 = vector.load %arg8[%c0_20, %c0_21] : memref<16x128xf32, #tpu.memory_space<vmem>>, vector<16x128xf32>
    %c0_22 = arith.constant 0 : index
    %c0_23 = arith.constant 0 : index
    %50 = vector.load %arg5[%c0_22, %c0_23] : memref<512x128xbf16, #tpu.memory_space<vmem>>, vector<512x128xbf16>
    %cst_24 = arith.constant dense<0.000000e+00> : vector<16x128xf32>
    %51 = tpu.matmul %48, %50, %cst_24 {dimension_numbers = #tpu.dot_dimension_numbers<[1], [0], [0], [1], [0, 0, 1, 1], [], []>} : vector<16x512xbf16>, vector<512x128xbf16>, vector<16x128xf32> -> vector<16x128xf32>
    %52 = arith.addf %49, %51 : vector<16x128xf32>
    %c0_25 = arith.constant 0 : index
    %c0_26 = arith.constant 0 : index
    %53 = vector.load %arg8[%c0_25, %c0_26] : memref<16x128xf32, #tpu.memory_space<vmem>>, vector<16x128xf32>
    tpu.vector_store %arg8[%c0_25, %c0_26], %52 {strides = array<i32>} : memref<16x128xf32, #tpu.memory_space<vmem>>, vector<16x128xf32>,
    %c0_i32_27 = arith.constant 0 : i32
    %54 = arith.cmpi eq, %arg1, %c0_i32_27 : i32
    %55 = arith.extui %54 : i1 to i32
    %c0_i32_28 = arith.constant 0 : i32
    %56 = arith.cmpi ne, %55, %c0_i32_28 : i32
    scf.if %56 {
      %c0_29 = arith.constant 0 : index
      %c0_30 = arith.constant 0 : index
      %57 = vector.load %arg8[%c0_29, %c0_30] : memref<16x128xf32, #tpu.memory_space<vmem>>, vector<16x128xf32>
      %c0_31 = arith.constant 0 : index
      %c0_32 = arith.constant 0 : index
      %58 = vector.load %arg6[%c0_31, %c0_32] : memref<1x128xf32, #tpu.memory_space<vmem>>, vector<1x128xf32>
      %59 = vector.broadcast %58 : vector<1x128xf32> to vector<16x128xf32>
      %60 = arith.addf %57, %59 : vector<16x128xf32>
      %c0_33 = arith.constant 0 : index
      %c0_34 = arith.constant 0 : index
      %61 = vector.load %arg7[%c0_33, %c0_34] : memref<16x128xf32, #tpu.memory_space<vmem>>, vector<16x128xf32>
      tpu.vector_store %arg7[%c0_33, %c0_34], %60 {strides = array<i32>} : memref<16x128xf32, #tpu.memory_space<vmem>>, vector<16x128xf32>,
    } else {
    }
    return
  }
  func.func @transform_0(%arg0: i32, %arg1: i32) -> (i32, i32) {
    %c0_i32 = arith.constant 0 : i32
    %c0_i32_0 = arith.constant 0 : i32
    return %arg0, %c0_i32 : i32, i32
  }
  func.func @transform_1(%arg0: i32, %arg1: i32) -> (i32, i32) {
    %c0_i32 = arith.constant 0 : i32
    %c0_i32_0 = arith.constant 0 : i32
    return %c0_i32, %arg1 : i32, i32
  }
  func.func @transform_2(%arg0: i32, %arg1: i32) -> (i32, i32) {
    %c0_i32 = arith.constant 0 : i32
    %c0_i32_0 = arith.constant 0 : i32
    return %c0_i32, %arg1 : i32, i32
  }
  func.func @transform_3(%arg0: i32, %arg1: i32) -> (i32, i32) {
    %c0_i32 = arith.constant 0 : i32
    %c0_i32_0 = arith.constant 0 : i32
    return %arg1, %c0_i32 : i32, i32
  }
  func.func @transform_4(%arg0: i32, %arg1: i32) -> (i32, i32) {
    %c0_i32 = arith.constant 0 : i32
    %c0_i32_0 = arith.constant 0 : i32
    %c0_i32_1 = arith.constant 0 : i32
    return %c0_i32, %c0_i32_0 : i32, i32
  }
  func.func @transform_5(%arg0: i32, %arg1: i32) -> (i32, i32) {
    %c0_i32 = arith.constant 0 : i32
    %c0_i32_0 = arith.constant 0 : i32
    return %arg0, %c0_i32 : i32, i32
  }
}

</mosaic_0001>

<llo_original>
// kernel: tpu_custom_call.1
$region0: #{tpu_custom_call.1}
  #allocation0 [shape = 'u32[]', space=smem, size = 0x4, offset = 0x4, fixed_abs, tag = 'smem constant byte address 0x4 - core index']
  #allocation1 [shape = 'u32[72,128]{1,0:T(1,128)}', space=vmem, size = 0x9000, scoped, tag = 'internal scratch']
  #allocation2 [shape = 'f32[16,128]{1,0:T(8,128)}', space=vmem, size = 0x2000, scoped, tag = 'scratch operand']
  %s0 = inlined_call_operand.hbm [shape: bf16[16,128], index: 0, kind: input, shape index: {}]
  %s1 = inlined_call_operand.hbm [shape: bf16[128,512], index: 1, kind: input, shape index: {}]
  %s2 = inlined_call_operand.hbm [shape: f32[1,512], index: 2, kind: input, shape index: {}]
  %s3 = inlined_call_operand.hbm [shape: bf16[512,128], index: 3, kind: input, shape index: {}]
  %s4 = inlined_call_operand.vmem [shape: f32[1,128], index: 4, kind: input, shape index: {}]
  %s5 = inlined_call_operand.hbm [shape: f32[16,128], index: 5, kind: output, shape index: {}]
  %s6 = sld [smem:[#allocation0]]
  $region54: #{tpu_custom_call.1} parent=0
    _
  %s8 = ssub.s32 1, %s6
  %s9 = scalar_select 0, %s8, %s6
  $region1: #{tpu_custom_call.1} parent=0
    #allocation3 [shape = 'u8[4096]{0}', space=vmem, size = 0x1000, scoped, tag = 'input window, operand 0, single buffered']
    #allocation4 [shape = 's32[1]{0}', space=sflag, size = 0x4, scoped, tag = 'scoped memory for tpu_custom_call.1']
    #allocation5 [shape = 's32[1]{0}', space=sflag, size = 0x4, scoped, tag = 'scoped memory for tpu_custom_call.1']
    #allocation6 [shape = 'u8[131072]{0}', space=vmem, size = 0x20000, scoped, tag = 'input window, operand 1, single buffered']
    #allocation7 [shape = 's32[1]{0}', space=sflag, size = 0x4, scoped, tag = 'scoped memory for tpu_custom_call.1']
    #allocation8 [shape = 'u8[2048]{0}', space=vmem, size = 0x800, scoped, tag = 'input window, operand 2, single buffered']
    #allocation9 [shape = 'u8[131072]{0}', space=vmem, size = 0x20000, scoped, tag = 'input window, operand 3, single buffered']
    #allocation10 [shape = 's32[1]{0}', space=sflag, size = 0x4, scoped, tag = 'scoped memory for tpu_custom_call.1']
    #allocation11 [shape = 'u8[8192]{0}', space=vmem, size = 0x2000, scoped, tag = 'output window, operand 0, single buffered']
    %10 = vsyncpa [#allocation4], 0
    %11 = vsyncpa [#allocation7], 0
    %12 = vsyncpa [#allocation10], 0
    %13 = vsyncpa [#allocation5], 0
    // Predicated region
    $region2: #{tpu_custom_call.1} parent=1 // pred_check
      _
    $region3: #{tpu_custom_call.1} parent=1 // pred_check_branch
      %15 = sbr.rel (0) target = $region5
    $region4: #{tpu_custom_call.1} parent=1 // pred_region
      %17 = vsyncadd [#allocation4], 0
      %s18 = sshll.u32 %s0, 4
      %s19 = int_to_ptr.hbm [resolvable:$true] %s18
      %s20 = sshll.u32 [#allocation3], 4
      %s21 = int_to_ptr.vmem [resolvable:$true] %s20
      %26 = dma.hbm_to_vmem [thread:$0]  %s19, 128, %s21, [#allocation4], 64, 64, 4
    $region5: #{tpu_custom_call.1} parent=1 // pred_fallthru
      _
    // Predicated region
    $region6: #{tpu_custom_call.1} parent=1 // pred_check
      _
    $region7: #{tpu_custom_call.1} parent=1 // pred_check_branch
      %28 = sbr.rel (0) target = $region9
    $region8: #{tpu_custom_call.1} parent=1 // pred_region
      %30 = vsyncadd [#allocation7], 0
      %s31 = sshll.u32 %s1, 4
      %s32 = int_to_ptr.hbm [resolvable:$true] %s31
      %s33 = sshll.u32 [#allocation6], 4
      %s34 = int_to_ptr.vmem [resolvable:$true] %s33
      %39 = dma.hbm_to_vmem [thread:$0]  %s32, 4096, %s34, [#allocation7], 256, 256, 16
    $region9: #{tpu_custom_call.1} parent=1 // pred_fallthru
      _
    // Predicated region
    $region10: #{tpu_custom_call.1} parent=1 // pred_check
      _
    $region11: #{tpu_custom_call.1} parent=1 // pred_check_branch
      %41 = sbr.rel (0) target = $region13
    $region12: #{tpu_custom_call.1} parent=1 // pred_region
      %43 = vsyncadd [#allocation7], 0
      %s45 = sshll.u32 %s2, 4
      %s46 = int_to_ptr.hbm [resolvable:$true] %s45
      %s47 = sshll.u32 [#allocation8], 4
      %s48 = int_to_ptr.vmem [resolvable:$true] %s47
      %50 = dma.hbm_to_vmem [thread:$0]  %s46, 64, %s48, [#allocation7]
    $region13: #{tpu_custom_call.1} parent=1 // pred_fallthru
      _
    // Predicated region
    $region14: #{tpu_custom_call.1} parent=1 // pred_check
      _
    $region15: #{tpu_custom_call.1} parent=1 // pred_check_branch
      %52 = sbr.rel (0) target = $region17
    $region16: #{tpu_custom_call.1} parent=1 // pred_region
      %54 = vsyncadd [#allocation10], 0
      %s55 = sshll.u32 %s3, 4
      %s56 = int_to_ptr.hbm [resolvable:$true] %s55
      %s57 = sshll.u32 [#allocation9], 4
      %s58 = int_to_ptr.vmem [resolvable:$true] %s57
      %63 = dma.hbm_to_vmem [thread:$0]  %s56, 4096, %s58, [#allocation10], 64, 64, 4
    $region17: #{tpu_custom_call.1} parent=1 // pred_fallthru
      _
    // Predicated region
    $region18: #{tpu_custom_call.1} parent=1 // pred_check
      _
    $region19: #{tpu_custom_call.1} parent=1 // pred_check_branch
      %65 = sbr.rel (0) target = $region21
    $region20: #{tpu_custom_call.1} parent=1 // pred_region
      _
    $region21: #{tpu_custom_call.1} parent=1 // pred_fallthru
      _
    // Predicated region
    $region22: #{tpu_custom_call.1} parent=1 // pred_check
      _
    $region23: #{tpu_custom_call.1} parent=1 // pred_check_branch
      %67 = sbr.rel (0) target = $region25
    $region24: #{tpu_custom_call.1} parent=1 // pred_region
      %69 = dma.done [#allocation4], 128
    $region25: #{tpu_custom_call.1} parent=1 // pred_fallthru
      _
    // Predicated region
    $region26: #{tpu_custom_call.1} parent=1 // pred_check
      _
    $region27: #{tpu_custom_call.1} parent=1 // pred_check_branch
      %71 = sbr.rel (0) target = $region29
    $region28: #{tpu_custom_call.1} parent=1 // pred_region
      %73 = dma.done [#allocation7], 4096
    $region29: #{tpu_custom_call.1} parent=1 // pred_fallthru
      _
    // Predicated region
    $region30: #{tpu_custom_call.1} parent=1 // pred_check
      _
    $region31: #{tpu_custom_call.1} parent=1 // pred_check_branch
      %75 = sbr.rel (0) target = $region33
    $region32: #{tpu_custom_call.1} parent=1 // pred_region
      %77 = dma.done [#allocation7], 64
    $region33: #{tpu_custom_call.1} parent=1 // pred_fallthru
      _
    // Predicated region
    $region34: #{tpu_custom_call.1} parent=1 // pred_check
      _
    $region35: #{tpu_custom_call.1} parent=1 // pred_check_branch
      %79 = sbr.rel (0) target = $region37
    $region36: #{tpu_custom_call.1} parent=1 // pred_region
      %81 = dma.done [#allocation10], 4096
    $region37: #{tpu_custom_call.1} parent=1 // pred_fallthru
      _
    %p82 = scmp.eq.s32.totalorder 0, 0
    // Predicated region
    $region38: #{tpu_custom_call.1} parent=1 // pred_check
      %p83 = pneg %p82
    $region39: #{tpu_custom_call.1} parent=1 // pred_check_branch
      %85 = sbr.rel (%p83) target = $region41
    $region40: #{tpu_custom_call.1} parent=1 // pred_region
      %86 = vst [vmem:[#allocation2] sm:$0xff] 0.0
      %87 = vst [vmem:[#allocation2 + $0x8] sm:$0xff] 0.0
    $region41: #{tpu_custom_call.1} parent=1 // pred_fallthru
      _
    %v88 = vld [vmem:[#allocation3] sm:$0xf]
    %v89 = vld [vmem:[#allocation3 + $0x4] sm:$0xf]
    %v90 = vld [vmem:[#allocation6] sm:$0xff]
    %v91 = vld [vmem:[#allocation6 + $0x8] sm:$0xff]
    %v92 = vld [vmem:[#allocation6 + $0x10] sm:$0xff]
    %v93 = vld [vmem:[#allocation6 + $0x18] sm:$0xff]
    %v94 = vld [vmem:[#allocation6 + $0x20] sm:$0xff]
    %v95 = vld [vmem:[#allocation6 + $0x28] sm:$0xff]
    %v96 = vld [vmem:[#allocation6 + $0x30] sm:$0xff]
    %v97 = vld [vmem:[#allocation6 + $0x38] sm:$0xff]
    %v98 = vld [vmem:[#allocation6 + $0x40] sm:$0xff]
    %v99 = vld [vmem:[#allocation6 + $0x48] sm:$0xff]
    %v100 = vld [vmem:[#allocation6 + $0x50] sm:$0xff]
    %v101 = vld [vmem:[#allocation6 + $0x58] sm:$0xff]
    %v102 = vld [vmem:[#allocation6 + $0x60] sm:$0xff]
    %v103 = vld [vmem:[#allocation6 + $0x68] sm:$0xff]
    %v104 = vld [vmem:[#allocation6 + $0x70] sm:$0xff]
    %v105 = vld [vmem:[#allocation6 + $0x78] sm:$0xff]
    %v106 = vld [vmem:[#allocation6 + $0x80] sm:$0xff]
    %v107 = vld [vmem:[#allocation6 + $0x88] sm:$0xff]
    %v108 = vld [vmem:[#allocation6 + $0x90] sm:$0xff]
    %v109 = vld [vmem:[#allocation6 + $0x98] sm:$0xff]
    %v110 = vld [vmem:[#allocation6 + $0xa0] sm:$0xff]
    %v111 = vld [vmem:[#allocation6 + $0xa8] sm:$0xff]
    %v112 = vld [vmem:[#allocation6 + $0xb0] sm:$0xff]
    %v113 = vld [vmem:[#allocation6 + $0xb8] sm:$0xff]
    %v114 = vld [vmem:[#allocation6 + $0xc0] sm:$0xff]
    %v115 = vld [vmem:[#allocation6 + $0xc8] sm:$0xff]
    %v116 = vld [vmem:[#allocation6 + $0xd0] sm:$0xff]
    %v117 = vld [vmem:[#allocation6 + $0xd8] sm:$0xff]
    %v118 = vld [vmem:[#allocation6 + $0xe0] sm:$0xff]
    %v119 = vld [vmem:[#allocation6 + $0xe8] sm:$0xff]
    %v120 = vld [vmem:[#allocation6 + $0xf0] sm:$0xff]
    %v121 = vld [vmem:[#allocation6 + $0xf8] sm:$0xff]
    %v122 = vld [vmem:[#allocation8] sm:$0xf]
    %v124 = vperm.slane %v122, 0
    %v125 = vperm.slane %v122, 1
    %v126 = vperm.slane %v122, 2
    %v127 = vperm.slane %v122, 3
    %v134 = vunpack.c.l.b16 %v88
    %v135 = vunpack.c.l.b16 %v89
    %v136 = vpack.c.b16 %v135, %v134
    %v170 = vunpack.c.l.b16 %v90
    %v171 = vunpack.c.h.b16 %v90
    %v172 = vunpack.c.l.b16 %v91
    %v173 = vunpack.c.h.b16 %v91
    %v174 = vunpack.c.l.b16 %v92
    %v175 = vunpack.c.h.b16 %v92
    %v176 = vunpack.c.l.b16 %v93
    %v177 = vunpack.c.h.b16 %v93
    %v178 = vunpack.c.l.b16 %v94
    %v179 = vunpack.c.h.b16 %v94
    %v180 = vunpack.c.l.b16 %v95
    %v181 = vunpack.c.h.b16 %v95
    %v182 = vunpack.c.l.b16 %v96
    %v183 = vunpack.c.h.b16 %v96
    %v184 = vunpack.c.l.b16 %v97
    %v185 = vunpack.c.h.b16 %v97
    %v186 = vunpack.c.l.b16 %v98
    %v187 = vunpack.c.h.b16 %v98
    %v188 = vunpack.c.l.b16 %v99
    %v189 = vunpack.c.h.b16 %v99
    %v190 = vunpack.c.l.b16 %v100
    %v191 = vunpack.c.h.b16 %v100
    %v192 = vunpack.c.l.b16 %v101
    %v193 = vunpack.c.h.b16 %v101
    %v194 = vunpack.c.l.b16 %v102
    %v195 = vunpack.c.h.b16 %v102
    %v196 = vunpack.c.l.b16 %v103
    %v197 = vunpack.c.h.b16 %v103
    %v198 = vunpack.c.l.b16 %v104
    %v199 = vunpack.c.h.b16 %v104
    %v200 = vunpack.c.l.b16 %v105
    %v201 = vunpack.c.h.b16 %v105
    %v202 = vunpack.c.l.b16 %v106
    %v203 = vunpack.c.h.b16 %v106
    %v204 = vunpack.c.l.b16 %v107
    %v205 = vunpack.c.h.b16 %v107
    %v206 = vunpack.c.l.b16 %v108
    %v207 = vunpack.c.h.b16 %v108
    %v208 = vunpack.c.l.b16 %v109
    %v209 = vunpack.c.h.b16 %v109
    %v210 = vunpack.c.l.b16 %v110
    %v211 = vunpack.c.h.b16 %v110
    %v212 = vunpack.c.l.b16 %v111
    %v213 = vunpack.c.h.b16 %v111
    %v214 = vunpack.c.l.b16 %v112
    %v215 = vunpack.c.h.b16 %v112
    %v216 = vunpack.c.l.b16 %v113
    %v217 = vunpack.c.h.b16 %v113
    %v218 = vunpack.c.l.b16 %v114
    %v219 = vunpack.c.h.b16 %v114
    %v220 = vunpack.c.l.b16 %v115
    %v221 = vunpack.c.h.b16 %v115
    %v222 = vunpack.c.l.b16 %v116
    %v223 = vunpack.c.h.b16 %v116
    %v224 = vunpack.c.l.b16 %v117
    %v225 = vunpack.c.h.b16 %v117
    %v226 = vunpack.c.l.b16 %v118
    %v227 = vunpack.c.h.b16 %v118
    %v228 = vunpack.c.l.b16 %v119
    %v229 = vunpack.c.h.b16 %v119
    %v230 = vunpack.c.l.b16 %v120
    %v231 = vunpack.c.h.b16 %v120
    %v232 = vunpack.c.l.b16 %v121
    %v233 = vunpack.c.h.b16 %v121
    %v234 = vpack.c.b16 %v174, %v170
    %v235 = vpack.c.b16 %v175, %v171
    %v236 = vpack.c.b16 %v176, %v172
    %v237 = vpack.c.b16 %v177, %v173
    %v238 = vpack.c.b16 %v182, %v178
    %v239 = vpack.c.b16 %v183, %v179
    %v240 = vpack.c.b16 %v184, %v180
    %v241 = vpack.c.b16 %v185, %v181
    %v242 = vpack.c.b16 %v190, %v186
    %v243 = vpack.c.b16 %v191, %v187
    %v244 = vpack.c.b16 %v192, %v188
    %v245 = vpack.c.b16 %v193, %v189
    %v246 = vpack.c.b16 %v198, %v194
    %v247 = vpack.c.b16 %v199, %v195
    %v248 = vpack.c.b16 %v200, %v196
    %v249 = vpack.c.b16 %v201, %v197
    %v250 = vpack.c.b16 %v206, %v202
    %v251 = vpack.c.b16 %v207, %v203
    %v252 = vpack.c.b16 %v208, %v204
    %v253 = vpack.c.b16 %v209, %v205
    %v254 = vpack.c.b16 %v214, %v210
    %v255 = vpack.c.b16 %v215, %v211
    %v256 = vpack.c.b16 %v216, %v212
    %v257 = vpack.c.b16 %v217, %v213
    %v258 = vpack.c.b16 %v222, %v218
    %v259 = vpack.c.b16 %v223, %v219
    %v260 = vpack.c.b16 %v224, %v220
    %v261 = vpack.c.b16 %v225, %v221
    %v262 = vpack.c.b16 %v230, %v226
    %v263 = vpack.c.b16 %v231, %v227
    %v264 = vpack.c.b16 %v232, %v228
    %v265 = vpack.c.b16 %v233, %v229
    %298 = vmatpush.bf16.msra.mxu0 %v262
    %299 = vmatpush.bf16.msra.mxu0 %v258
    %300 = vmatpush.bf16.msra.mxu0 %v254
    %301 = vmatpush.bf16.msra.mxu0 %v250
    %302 = vmatpush.bf16.msra.mxu0 %v246
    %303 = vmatpush.bf16.msra.mxu0 %v242
    %304 = vmatpush.bf16.msra.mxu0 %v238
    %305 = vmatpush.bf16.msra.mxu0 %v234
    %306 = vmatmul.bf16.gmra.mxu0 %v136
    %v307 = vpop.f32.mrf.mxu0
    %v308 = vadd.f32 %v124, %v307
    %v309 = vpop.f32.mrf.mxu0
    %v310 = vadd.f32 %v124, %v309
    %311 = vdwg.mxu0
    %312 = vmatpush.bf16.msra.mxu0 %v263
    %313 = vmatpush.bf16.msra.mxu0 %v259
    %314 = vmatpush.bf16.msra.mxu0 %v255
    %315 = vmatpush.bf16.msra.mxu0 %v251
    %316 = vmatpush.bf16.msra.mxu0 %v247
    %317 = vmatpush.bf16.msra.mxu0 %v243
    %318 = vmatpush.bf16.msra.mxu0 %v239
    %319 = vmatpush.bf16.msra.mxu0 %v235
    %320 = vmatmul.bf16.gmra.mxu0 %v136
    %v321 = vpop.f32.mrf.mxu0
    %v322 = vadd.f32 %v125, %v321
    %v323 = vpop.f32.mrf.mxu0
    %v324 = vadd.f32 %v125, %v323
    %325 = vdwg.mxu0
    %326 = vmatpush.bf16.msra.mxu0 %v264
    %327 = vmatpush.bf16.msra.mxu0 %v260
    %328 = vmatpush.bf16.msra.mxu0 %v256
    %329 = vmatpush.bf16.msra.mxu0 %v252
    %330 = vmatpush.bf16.msra.mxu0 %v248
    %331 = vmatpush.bf16.msra.mxu0 %v244
    %332 = vmatpush.bf16.msra.mxu0 %v240
    %333 = vmatpush.bf16.msra.mxu0 %v236
    %334 = vmatmul.bf16.gmra.mxu0 %v136
    %v335 = vpop.f32.mrf.mxu0
    %v336 = vadd.f32 %v126, %v335
    %v337 = vpop.f32.mrf.mxu0
    %v338 = vadd.f32 %v126, %v337
    %339 = vdwg.mxu0
    %340 = vmatpush.bf16.msra.mxu0 %v265
    %341 = vmatpush.bf16.msra.mxu0 %v261
    %342 = vmatpush.bf16.msra.mxu0 %v257
    %343 = vmatpush.bf16.msra.mxu0 %v253
    %344 = vmatpush.bf16.msra.mxu0 %v249
    %345 = vmatpush.bf16.msra.mxu0 %v245
    %346 = vmatpush.bf16.msra.mxu0 %v241
    %347 = vmatpush.bf16.msra.mxu0 %v237
    %348 = vmatmul.bf16.gmra.mxu0 %v136
    %v349 = vpop.f32.mrf.mxu0
    %v350 = vadd.f32 %v127, %v349
    %v351 = vpop.f32.mrf.mxu0
    %v352 = vadd.f32 %v127, %v351
    %353 = vdwg.mxu0
    %v354 = vmul.f32 %v308, 0.5
    %v355 = vmul.f32 %v322, 0.5
    %v356 = vmul.f32 %v336, 0.5
    %v357 = vmul.f32 %v350, 0.5
    %v358 = vmul.f32 %v310, 0.5
    %v359 = vmul.f32 %v324, 0.5
    %v360 = vmul.f32 %v338, 0.5
    %v361 = vmul.f32 %v352, 0.5
    %v362 = vmul.f32 %v308, 0.70710677
    %v363 = vmul.f32 %v322, 0.70710677
    %v364 = vmul.f32 %v336, 0.70710677
    %v365 = vmul.f32 %v350, 0.70710677
    %v366 = vmul.f32 %v310, 0.70710677
    %v367 = vmul.f32 %v324, 0.70710677
    %v368 = vmul.f32 %v338, 0.70710677
    %v369 = vmul.f32 %v352, 0.70710677
    %v370 = vand.u32 2147483647, %v362
    %v371 = vand.u32 2147483647, %v363
    %v372 = vand.u32 2147483647, %v364
    %v373 = vand.u32 2147483647, %v365
    %v374 = vand.u32 2147483647, %v366
    %v375 = vand.u32 2147483647, %v367
    %v376 = vand.u32 2147483647, %v368
    %v377 = vand.u32 2147483647, %v369
    %v378 = vmul.f32 %v370, 0.3275911
    %v379 = vmul.f32 %v371, 0.3275911
    %v380 = vmul.f32 %v372, 0.3275911
    %v381 = vmul.f32 %v373, 0.3275911
    %v382 = vmul.f32 %v374, 0.3275911
    %v383 = vmul.f32 %v375, 0.3275911
    %v384 = vmul.f32 %v376, 0.3275911
    %v385 = vmul.f32 %v377, 0.3275911
    %v386 = vadd.f32 %v378, 1.0
    %v387 = vadd.f32 %v379, 1.0
    %v388 = vadd.f32 %v380, 1.0
    %v389 = vadd.f32 %v381, 1.0
    %v390 = vadd.f32 %v382, 1.0
    %v391 = vadd.f32 %v383, 1.0
    %v392 = vadd.f32 %v384, 1.0
    %v393 = vadd.f32 %v385, 1.0
    %v394 = vrcp.pop %v386
    %v395 = vrcp.pop %v387
    %v396 = vrcp.pop %v388
    %v397 = vrcp.pop %v389
    %v398 = vrcp.pop %v390
    %v399 = vrcp.pop %v391
    %v400 = vrcp.pop %v392
    %v401 = vrcp.pop %v393
    %v402 = vmul.f32 %v394, 1.0614054
    %v403 = vmul.f32 %v395, 1.0614054
    %v404 = vmul.f32 %v396, 1.0614054
    %v405 = vmul.f32 %v397, 1.0614054
    %v406 = vmul.f32 %v398, 1.0614054
    %v407 = vmul.f32 %v399, 1.0614054
    %v408 = vmul.f32 %v400, 1.0614054
    %v409 = vmul.f32 %v401, 1.0614054
    %v410 = vadd.f32 %v402, -1.4531521
    %v411 = vadd.f32 %v403, -1.4531521
    %v412 = vadd.f32 %v404, -1.4531521
    %v413 = vadd.f32 %v405, -1.4531521
    %v414 = vadd.f32 %v406, -1.4531521
    %v415 = vadd.f32 %v407, -1.4531521
    %v416 = vadd.f32 %v408, -1.4531521
    %v417 = vadd.f32 %v409, -1.4531521
    %v418 = vmul.f32 %v394, %v410
    %v419 = vmul.f32 %v395, %v411
    %v420 = vmul.f32 %v396, %v412
    %v421 = vmul.f32 %v397, %v413
    %v422 = vmul.f32 %v398, %v414
    %v423 = vmul.f32 %v399, %v415
    %v424 = vmul.f32 %v400, %v416
    %v425 = vmul.f32 %v401, %v417
    %v426 = vadd.f32 %v418, 1.4214138
    %v427 = vadd.f32 %v419, 1.4214138
    %v428 = vadd.f32 %v420, 1.4214138
    %v429 = vadd.f32 %v421, 1.4214138
    %v430 = vadd.f32 %v422, 1.4214138
    %v431 = vadd.f32 %v423, 1.4214138
    %v432 = vadd.f32 %v424, 1.4214138
    %v433 = vadd.f32 %v425, 1.4214138
    %v434 = vmul.f32 %v394, %v426
    %v435 = vmul.f32 %v395, %v427
    %v436 = vmul.f32 %v396, %v428
    %v437 = vmul.f32 %v397, %v429
    %v438 = vmul.f32 %v398, %v430
    %v439 = vmul.f32 %v399, %v431
    %v440 = vmul.f32 %v400, %v432
    %v441 = vmul.f32 %v401, %v433
    %v442 = vadd.f32 %v434, -0.28449672
    %v443 = vadd.f32 %v435, -0.28449672
    %v444 = vadd.f32 %v436, -0.28449672
    %v445 = vadd.f32 %v437, -0.28449672
    %v446 = vadd.f32 %v438, -0.28449672
    %v447 = vadd.f32 %v439, -0.28449672
    %v448 = vadd.f32 %v440, -0.28449672
    %v449 = vadd.f32 %v441, -0.28449672
    %v450 = vmul.f32 %v394, %v442
    %v451 = vmul.f32 %v395, %v443
    %v452 = vmul.f32 %v396, %v444
    %v453 = vmul.f32 %v397, %v445
    %v454 = vmul.f32 %v398, %v446
    %v455 = vmul.f32 %v399, %v447
    %v456 = vmul.f32 %v400, %v448
    %v457 = vmul.f32 %v401, %v449
    %v458 = vadd.f32 %v450, 0.2548296
    %v459 = vadd.f32 %v451, 0.2548296
    %v460 = vadd.f32 %v452, 0.2548296
    %v461 = vadd.f32 %v453, 0.2548296
    %v462 = vadd.f32 %v454, 0.2548296
    %v463 = vadd.f32 %v455, 0.2548296
    %v464 = vadd.f32 %v456, 0.2548296
    %v465 = vadd.f32 %v457, 0.2548296
    %v466 = vmul.f32 %v394, %v458
    %v467 = vmul.f32 %v395, %v459
    %v468 = vmul.f32 %v396, %v460
    %v469 = vmul.f32 %v397, %v461
    %v470 = vmul.f32 %v398, %v462
    %v471 = vmul.f32 %v399, %v463
    %v472 = vmul.f32 %v400, %v464
    %v473 = vmul.f32 %v401, %v465
    %v474 = vmul.f32 %v370, %v370
    %v475 = vmul.f32 %v371, %v371
    %v476 = vmul.f32 %v372, %v372
    %v477 = vmul.f32 %v373, %v373
    %v478 = vmul.f32 %v374, %v374
    %v479 = vmul.f32 %v375, %v375
    %v480 = vmul.f32 %v376, %v376
    %v481 = vmul.f32 %v377, %v377
    %v482 = vsub.f32 0.0, %v474
    %v483 = vsub.f32 0.0, %v475
    %v484 = vsub.f32 0.0, %v476
    %v485 = vsub.f32 0.0, %v477
    %v486 = vsub.f32 0.0, %v478
    %v487 = vsub.f32 0.0, %v479
    %v488 = vsub.f32 0.0, %v480
    %v489 = vsub.f32 0.0, %v481
    %v490 = vmul.f32 %v482, 1.442695
    %v491 = vpow.pop %v490
    %v492 = vmul.f32 %v483, 1.442695
    %v493 = vpow.pop %v492
    %v494 = vmul.f32 %v484, 1.442695
    %v495 = vpow.pop %v494
    %v496 = vmul.f32 %v485, 1.442695
    %v497 = vpow.pop %v496
    %v498 = vmul.f32 %v486, 1.442695
    %v499 = vpow.pop %v498
    %v500 = vmul.f32 %v487, 1.442695
    %v501 = vpow.pop %v500
    %v502 = vmul.f32 %v488, 1.442695
    %v503 = vpow.pop %v502
    %v504 = vmul.f32 %v489, 1.442695
    %v505 = vpow.pop %v504
    %v506 = vmul.f32 %v466, %v491
    %v507 = vmul.f32 %v467, %v493
    %v508 = vmul.f32 %v468, %v495
    %v509 = vmul.f32 %v469, %v497
    %v510 = vmul.f32 %v470, %v499
    %v511 = vmul.f32 %v471, %v501
    %v512 = vmul.f32 %v472, %v503
    %v513 = vmul.f32 %v473, %v505
    %v514 = vsub.f32 1.0, %v506
    %v515 = vsub.f32 1.0, %v507
    %v516 = vsub.f32 1.0, %v508
    %v517 = vsub.f32 1.0, %v509
    %v518 = vsub.f32 1.0, %v510
    %v519 = vsub.f32 1.0, %v511
    %v520 = vsub.f32 1.0, %v512
    %v521 = vsub.f32 1.0, %v513
    %vm522 = vcmp.lt.f32.partialorder %v362, 0.0
    %vm523 = vcmp.lt.f32.partialorder %v363, 0.0
    %vm524 = vcmp.lt.f32.partialorder %v364, 0.0
    %vm525 = vcmp.lt.f32.partialorder %v365, 0.0
    %vm526 = vcmp.lt.f32.partialorder %v366, 0.0
    %vm527 = vcmp.lt.f32.partialorder %v367, 0.0
    %vm528 = vcmp.lt.f32.partialorder %v368, 0.0
    %vm529 = vcmp.lt.f32.partialorder %v369, 0.0
    %v530 = vsub.f32 0.0, %v514
    %v531 = vsub.f32 0.0, %v515
    %v532 = vsub.f32 0.0, %v516
    %v533 = vsub.f32 0.0, %v517
    %v534 = vsub.f32 0.0, %v518
    %v535 = vsub.f32 0.0, %v519
    %v536 = vsub.f32 0.0, %v520
    %v537 = vsub.f32 0.0, %v521
    %v538 = vsel %vm522, %v530, %v514
    %v539 = vsel %vm523, %v531, %v515
    %v540 = vsel %vm524, %v532, %v516
    %v541 = vsel %vm525, %v533, %v517
    %v542 = vsel %vm526, %v534, %v518
    %v543 = vsel %vm527, %v535, %v519
    %v544 = vsel %vm528, %v536, %v520
    %v545 = vsel %vm529, %v537, %v521
    %v546 = vadd.f32 %v538, 1.0
    %v547 = vadd.f32 %v539, 1.0
    %v548 = vadd.f32 %v540, 1.0
    %v549 = vadd.f32 %v541, 1.0
    %v550 = vadd.f32 %v542, 1.0
    %v551 = vadd.f32 %v543, 1.0
    %v552 = vadd.f32 %v544, 1.0
    %v553 = vadd.f32 %v545, 1.0
    %v554 = vmul.f32 %v354, %v546
    %v555 = vmul.f32 %v355, %v547
    %v556 = vmul.f32 %v356, %v548
    %v557 = vmul.f32 %v357, %v549
    %v558 = vmul.f32 %v358, %v550
    %v559 = vmul.f32 %v359, %v551
    %v560 = vmul.f32 %v360, %v552
    %v561 = vmul.f32 %v361, %v553
    %v562 = vpack.c.bf16 %v558, %v554
    %v563 = vpack.c.bf16 %v559, %v555
    %v564 = vpack.c.bf16 %v560, %v556
    %v565 = vpack.c.bf16 %v561, %v557
    %v566 = vld [vmem:[#allocation2] sm:$0xff]
    %v567 = vld [vmem:[#allocation2 + $0x8] sm:$0xff]
    %v568 = vld [vmem:[#allocation9] sm:$0xf]
    %v569 = vld [vmem:[#allocation9 + $0x4] sm:$0xf]
    %v570 = vld [vmem:[#allocation9 + $0x8] sm:$0xf]
    %v571 = vld [vmem:[#allocation9 + $0xc] sm:$0xf]
    %v572 = vld [vmem:[#allocation9 + $0x10] sm:$0xf]
    %v573 = vld [vmem:[#allocation9 + $0x14] sm:$0xf]
    %v574 = vld [vmem:[#allocation9 + $0x18] sm:$0xf]
    %v575 = vld [vmem:[#allocation9 + $0x1c] sm:$0xf]
    %v576 = vld [vmem:[#allocation9 + $0x20] sm:$0xf]
    %v577 = vld [vmem:[#allocation9 + $0x24] sm:$0xf]
    %v578 = vld [vmem:[#allocation9 + $0x28] sm:$0xf]
    %v579 = vld [vmem:[#allocation9 + $0x2c] sm:$0xf]
    %v580 = vld [vmem:[#allocation9 + $0x30] sm:$0xf]
    %v581 = vld [vmem:[#allocation9 + $0x34] sm:$0xf]
    %v582 = vld [vmem:[#allocation9 + $0x38] sm:$0xf]
    %v583 = vld [vmem:[#allocation9 + $0x3c] sm:$0xf]
    %v584 = vld [vmem:[#allocation9 + $0x40] sm:$0xf]
    %v585 = vld [vmem:[#allocation9 + $0x44] sm:$0xf]
    %v586 = vld [vmem:[#allocation9 + $0x48] sm:$0xf]
    %v587 = vld [vmem:[#allocation9 + $0x4c] sm:$0xf]
    %v588 = vld [vmem:[#allocation9 + $0x50] sm:$0xf]
    %v589 = vld [vmem:[#allocation9 + $0x54] sm:$0xf]
    %v590 = vld [vmem:[#allocation9 + $0x58] sm:$0xf]
    %v591 = vld [vmem:[#allocation9 + $0x5c] sm:$0xf]
    %v592 = vld [vmem:[#allocation9 + $0x60] sm:$0xf]
    %v593 = vld [vmem:[#allocation9 + $0x64] sm:$0xf]
    %v594 = vld [vmem:[#allocation9 + $0x68] sm:$0xf]
    %v595 = vld [vmem:[#allocation9 + $0x6c] sm:$0xf]
    %v596 = vld [vmem:[#allocation9 + $0x70] sm:$0xf]
    %v597 = vld [vmem:[#allocation9 + $0x74] sm:$0xf]
    %v598 = vld [vmem:[#allocation9 + $0x78] sm:$0xf]
    %v599 = vld [vmem:[#allocation9 + $0x7c] sm:$0xf]
    %v600 = vld [vmem:[#allocation9 + $0x80] sm:$0xf]
    %v601 = vld [vmem:[#allocation9 + $0x84] sm:$0xf]
    %v602 = vld [vmem:[#allocation9 + $0x88] sm:$0xf]
    %v603 = vld [vmem:[#allocation9 + $0x8c] sm:$0xf]
    %v604 = vld [vmem:[#allocation9 + $0x90] sm:$0xf]
    %v605 = vld [vmem:[#allocation9 + $0x94] sm:$0xf]
    %v606 = vld [vmem:[#allocation9 + $0x98] sm:$0xf]
    %v607 = vld [vmem:[#allocation9 + $0x9c] sm:$0xf]
    %v608 = vld [vmem:[#allocation9 + $0xa0] sm:$0xf]
    %v609 = vld [vmem:[#allocation9 + $0xa4] sm:$0xf]
    %v610 = vld [vmem:[#allocation9 + $0xa8] sm:$0xf]
    %v611 = vld [vmem:[#allocation9 + $0xac] sm:$0xf]
    %v612 = vld [vmem:[#allocation9 + $0xb0] sm:$0xf]
    %v613 = vld [vmem:[#allocation9 + $0xb4] sm:$0xf]
    %v614 = vld [vmem:[#allocation9 + $0xb8] sm:$0xf]
    %v615 = vld [vmem:[#allocation9 + $0xbc] sm:$0xf]
    %v616 = vld [vmem:[#allocation9 + $0xc0] sm:$0xf]
    %v617 = vld [vmem:[#allocation9 + $0xc4] sm:$0xf]
    %v618 = vld [vmem:[#allocation9 + $0xc8] sm:$0xf]
    %v619 = vld [vmem:[#allocation9 + $0xcc] sm:$0xf]
    %v620 = vld [vmem:[#allocation9 + $0xd0] sm:$0xf]
    %v621 = vld [vmem:[#allocation9 + $0xd4] sm:$0xf]
    %v622 = vld [vmem:[#allocation9 + $0xd8] sm:$0xf]
    %v623 = vld [vmem:[#allocation9 + $0xdc] sm:$0xf]
    %v624 = vld [vmem:[#allocation9 + $0xe0] sm:$0xf]
    %v625 = vld [vmem:[#allocation9 + $0xe4] sm:$0xf]
    %v626 = vld [vmem:[#allocation9 + $0xe8] sm:$0xf]
    %v627 = vld [vmem:[#allocation9 + $0xec] sm:$0xf]
    %v628 = vld [vmem:[#allocation9 + $0xf0] sm:$0xf]
    %v629 = vld [vmem:[#allocation9 + $0xf4] sm:$0xf]
    %v630 = vld [vmem:[#allocation9 + $0xf8] sm:$0xf]
    %v631 = vld [vmem:[#allocation9 + $0xfc] sm:$0xf]
    %v696 = vunpack.c.l.b16 %v568
    %v697 = vunpack.c.l.b16 %v569
    %v698 = vunpack.c.l.b16 %v570
    %v699 = vunpack.c.l.b16 %v571
    %v700 = vunpack.c.l.b16 %v572
    %v701 = vunpack.c.l.b16 %v573
    %v702 = vunpack.c.l.b16 %v574
    %v703 = vunpack.c.l.b16 %v575
    %v704 = vunpack.c.l.b16 %v576
    %v705 = vunpack.c.l.b16 %v577
    %v706 = vunpack.c.l.b16 %v578
    %v707 = vunpack.c.l.b16 %v579
    %v708 = vunpack.c.l.b16 %v580
    %v709 = vunpack.c.l.b16 %v581
    %v710 = vunpack.c.l.b16 %v582
    %v711 = vunpack.c.l.b16 %v583
    %v712 = vunpack.c.l.b16 %v584
    %v713 = vunpack.c.l.b16 %v585
    %v714 = vunpack.c.l.b16 %v586
    %v715 = vunpack.c.l.b16 %v587
    %v716 = vunpack.c.l.b16 %v588
    %v717 = vunpack.c.l.b16 %v589
    %v718 = vunpack.c.l.b16 %v590
    %v719 = vunpack.c.l.b16 %v591
    %v720 = vunpack.c.l.b16 %v592
    %v721 = vunpack.c.l.b16 %v593
    %v722 = vunpack.c.l.b16 %v594
    %v723 = vunpack.c.l.b16 %v595
    %v724 = vunpack.c.l.b16 %v596
    %v725 = vunpack.c.l.b16 %v597
    %v726 = vunpack.c.l.b16 %v598
    %v727 = vunpack.c.l.b16 %v599
    %v728 = vunpack.c.l.b16 %v600
    %v729 = vunpack.c.l.b16 %v601
    %v730 = vunpack.c.l.b16 %v602
    %v731 = vunpack.c.l.b16 %v603
    %v732 = vunpack.c.l.b16 %v604
    %v733 = vunpack.c.l.b16 %v605
    %v734 = vunpack.c.l.b16 %v606
    %v735 = vunpack.c.l.b16 %v607
    %v736 = vunpack.c.l.b16 %v608
    %v737 = vunpack.c.l.b16 %v609
    %v738 = vunpack.c.l.b16 %v610
    %v739 = vunpack.c.l.b16 %v611
    %v740 = vunpack.c.l.b16 %v612
    %v741 = vunpack.c.l.b16 %v613
    %v742 = vunpack.c.l.b16 %v614
    %v743 = vunpack.c.l.b16 %v615
    %v744 = vunpack.c.l.b16 %v616
    %v745 = vunpack.c.l.b16 %v617
    %v746 = vunpack.c.l.b16 %v618
    %v747 = vunpack.c.l.b16 %v619
    %v748 = vunpack.c.l.b16 %v620
    %v749 = vunpack.c.l.b16 %v621
    %v750 = vunpack.c.l.b16 %v622
    %v751 = vunpack.c.l.b16 %v623
    %v752 = vunpack.c.l.b16 %v624
    %v753 = vunpack.c.l.b16 %v625
    %v754 = vunpack.c.l.b16 %v626
    %v755 = vunpack.c.l.b16 %v627
    %v756 = vunpack.c.l.b16 %v628
    %v757 = vunpack.c.l.b16 %v629
    %v758 = vunpack.c.l.b16 %v630
    %v759 = vunpack.c.l.b16 %v631
    %v760 = vpack.c.b16 %v697, %v696
    %v761 = vpack.c.b16 %v699, %v698
    %v762 = vpack.c.b16 %v701, %v700
    %v763 = vpack.c.b16 %v703, %v702
    %v764 = vpack.c.b16 %v705, %v704
    %v765 = vpack.c.b16 %v707, %v706
    %v766 = vpack.c.b16 %v709, %v708
    %v767 = vpack.c.b16 %v711, %v710
    %v768 = vpack.c.b16 %v713, %v712
    %v769 = vpack.c.b16 %v715, %v714
    %v770 = vpack.c.b16 %v717, %v716
    %v771 = vpack.c.b16 %v719, %v718
    %v772 = vpack.c.b16 %v721, %v720
    %v773 = vpack.c.b16 %v723, %v722
    %v774 = vpack.c.b16 %v725, %v724
    %v775 = vpack.c.b16 %v727, %v726
    %v776 = vpack.c.b16 %v729, %v728
    %v777 = vpack.c.b16 %v731, %v730
    %v778 = vpack.c.b16 %v733, %v732
    %v779 = vpack.c.b16 %v735, %v734
    %v780 = vpack.c.b16 %v737, %v736
    %v781 = vpack.c.b16 %v739, %v738
    %v782 = vpack.c.b16 %v741, %v740
    %v783 = vpack.c.b16 %v743, %v742
    %v784 = vpack.c.b16 %v745, %v744
    %v785 = vpack.c.b16 %v747, %v746
    %v786 = vpack.c.b16 %v749, %v748
    %v787 = vpack.c.b16 %v751, %v750
    %v788 = vpack.c.b16 %v753, %v752
    %v789 = vpack.c.b16 %v755, %v754
    %v790 = vpack.c.b16 %v757, %v756
    %v791 = vpack.c.b16 %v759, %v758
    %824 = vmatpush.bf16.msra.mxu0 %v767
    %825 = vmatpush.bf16.msra.mxu0 %v766
    %826 = vmatpush.bf16.msra.mxu0 %v765
    %827 = vmatpush.bf16.msra.mxu0 %v764
    %828 = vmatpush.bf16.msra.mxu0 %v763
    %829 = vmatpush.bf16.msra.mxu0 %v762
    %830 = vmatpush.bf16.msra.mxu0 %v761
    %831 = vmatpush.bf16.msra.mxu0 %v760
    %832 = vmatmul.bf16.gmra.mxu0 %v562
    %v833 = vpop.f32.mrf.mxu0
    %v834 = vadd.f32 0.0, %v833
    %v835 = vpop.f32.mrf.mxu0
    %v836 = vadd.f32 0.0, %v835
    %837 = vdwg.mxu0
    %838 = vmatpush.bf16.msra.mxu0 %v775
    %839 = vmatpush.bf16.msra.mxu0 %v774
    %840 = vmatpush.bf16.msra.mxu0 %v773
    %841 = vmatpush.bf16.msra.mxu0 %v772
    %842 = vmatpush.bf16.msra.mxu0 %v771
    %843 = vmatpush.bf16.msra.mxu0 %v770
    %844 = vmatpush.bf16.msra.mxu0 %v769
    %845 = vmatpush.bf16.msra.mxu0 %v768
    %846 = vmatmul.bf16.gmra.mxu0 %v563
    %v847 = vpop.f32.mrf.mxu0
    %v848 = vadd.f32 %v834, %v847
    %v849 = vpop.f32.mrf.mxu0
    %v850 = vadd.f32 %v836, %v849
    %851 = vdwg.mxu0
    %852 = vmatpush.bf16.msra.mxu0 %v783
    %853 = vmatpush.bf16.msra.mxu0 %v782
    %854 = vmatpush.bf16.msra.mxu0 %v781
    %855 = vmatpush.bf16.msra.mxu0 %v780
    %856 = vmatpush.bf16.msra.mxu0 %v779
    %857 = vmatpush.bf16.msra.mxu0 %v778
    %858 = vmatpush.bf16.msra.mxu0 %v777
    %859 = vmatpush.bf16.msra.mxu0 %v776
    %860 = vmatmul.bf16.gmra.mxu0 %v564
    %v861 = vpop.f32.mrf.mxu0
    %v862 = vadd.f32 %v848, %v861
    %v863 = vpop.f32.mrf.mxu0
    %v864 = vadd.f32 %v850, %v863
    %865 = vdwg.mxu0
    %866 = vmatpush.bf16.msra.mxu0 %v791
    %867 = vmatpush.bf16.msra.mxu0 %v790
    %868 = vmatpush.bf16.msra.mxu0 %v789
    %869 = vmatpush.bf16.msra.mxu0 %v788
    %870 = vmatpush.bf16.msra.mxu0 %v787
    %871 = vmatpush.bf16.msra.mxu0 %v786
    %872 = vmatpush.bf16.msra.mxu0 %v785
    %873 = vmatpush.bf16.msra.mxu0 %v784
    %874 = vmatmul.bf16.gmra.mxu0 %v565
    %v875 = vpop.f32.mrf.mxu0
    %v876 = vadd.f32 %v862, %v875
    %v877 = vpop.f32.mrf.mxu0
    %v878 = vadd.f32 %v864, %v877
    %879 = vdwg.mxu0
    %v880 = vadd.f32 %v566, %v876
    %v881 = vadd.f32 %v567, %v878
    %882 = vst [vmem:[#allocation2] sm:$0xff] %v880
    %883 = vst [vmem:[#allocation2 + $0x8] sm:$0xff] %v881
    // Predicated region
    $region42: #{tpu_custom_call.1} parent=1 // pred_check
      %p884 = pneg %p82
    $region43: #{tpu_custom_call.1} parent=1 // pred_check_branch
      %886 = sbr.rel (%p884) target = $region45
    $region44: #{tpu_custom_call.1} parent=1 // pred_region
      %v887 = vld [vmem:[#allocation2] sm:$0xff]
      %v888 = vld [vmem:[#allocation2 + $0x8] sm:$0xff]
      %v889 = vld [vmem:[%s4] sm:$0x1]
      %v891 = vperm.slane %v889, 0
      %v893 = vadd.f32 %v887, %v891
      %v894 = vadd.f32 %v888, %v891
      %895 = vst [vmem:[#allocation11] sm:$0xff] %v893
      %896 = vst [vmem:[#allocation11 + $0x8] sm:$0xff] %v894
    $region45: #{tpu_custom_call.1} parent=1 // pred_fallthru
      _
    // Predicated region
    $region46: #{tpu_custom_call.1} parent=1 // pred_check
      _
    $region47: #{tpu_custom_call.1} parent=1 // pred_check_branch
      %898 = sbr.rel (0) target = $region49
    $region48: #{tpu_custom_call.1} parent=1 // pred_region
      %900 = vsyncadd [#allocation5], 0
      %s901 = sshll.u32 [#allocation11], 4
      %s902 = int_to_ptr.vmem [resolvable:$true] %s901
      %s903 = sshll.u32 %s5, 4
      %s904 = int_to_ptr.hbm [resolvable:$true] %s903
      %909 = dma.vmem_to_hbm [thread:$0]  %s902, 256, %s904, [#allocation5], 128, 128, 8
    $region49: #{tpu_custom_call.1} parent=1 // pred_fallthru
      _
    // Predicated region
    $region50: #{tpu_custom_call.1} parent=1 // pred_check
      _
    $region51: #{tpu_custom_call.1} parent=1 // pred_check_branch
      %911 = sbr.rel (0) target = $region53
    $region52: #{tpu_custom_call.1} parent=1 // pred_region
      %913 = dma.done [#allocation5], 256
    $region53: #{tpu_custom_call.1} parent=1 // pred_fallthru
      _
    %914 = vsyncpa [#allocation4], 1
    %915 = vsyncpa [#allocation7], 1
    %916 = vsyncpa [#allocation10], 1
    %917 = vsyncpa [#allocation5], 1

</llo_original>
